<compile_context>
chip_gen: v6e
topology: v6e:2x2x1
jax: 0.10.0
libtpu: 0.0.40
codegen_flags: <defaults>
</compile_context>

<pallas_src>
import functools
import math

import jax
import jax.numpy as jnp
from jax.experimental import pallas as pl
from jax.experimental.pallas import tpu as pltpu


def _round_up(x, m):
    return ((x + m - 1) // m) * m


def _tpu_vmem_and_cores():
    """Best-effort hardware introspection; conservative (v7x-safe) fallbacks."""
    vmem_capacity = 64 << 20          # v7x per-TC VMEM; safe lower bound everywhere
    cores = 1
    try:
        info = pltpu.get_tpu_info()
        cap = getattr(info, "vmem_capacity_bytes", None)
        if cap:
            vmem_capacity = int(cap)
        for attr in ("num_cores", "tensorcore_count", "core_count", "num_tensorcores"):
            v = getattr(info, attr, None)
            if isinstance(v, int) and v > 0:
                cores = v
                break
    except Exception:
        pass
    try:
        kind = jax.devices()[0].device_kind.lower()
    except Exception:
        kind = ""
    if "v7" in kind:
        # v7x: 2 TensorCores per chip, 64 MiB VMEM per TC.
        cores = max(cores, 2)
        vmem_capacity = min(vmem_capacity, 64 << 20)
    return vmem_capacity, cores


def _rmsnorm_kernel(x_ref, w_ref, o_ref, *, eps, inv_dim):
    # x_ref: (TM, D), w_ref: (1, D), o_ref: (TM, D)
    x = x_ref[...]
    xf = x.astype(jnp.float32)                                   # x.float() (no-op for f32)
    ms = jnp.sum(xf * xf, axis=-1, keepdims=True) * inv_dim      # pow(2).mean(-1, keepdim=True)
    normed = (xf * jax.lax.rsqrt(ms + eps)).astype(x_ref.dtype)  # rsqrt on EUP; .type_as(x)
    o_ref[...] = (normed * w_ref[...]).astype(o_ref.dtype)       # output * weight


def rmsnorm(x, weight, eps, *, block_rows=None, out_dtype=None,
            torch_promote=False, allow_input_fusion=None):
    """x: (..., dim); weight: (dim,). Matches PyTorch RMSNorm.forward.

    out_dtype defaults to x.dtype (minimizes HBM writeback). Pass
    torch_promote=True (or an explicit out_dtype) for strict torch-style
    dtype promotion of the final `output * weight`.
    """
    orig_shape = x.shape
    dim = orig_shape[-1]
    rows = int(math.prod(orig_shape[:-1])) if len(orig_shape) > 1 else 1

    if out_dtype is None:
        out_dtype = (jnp.promote_types(x.dtype, weight.dtype)
                     if torch_promote else x.dtype)

    in_bytes = jnp.dtype(x.dtype).itemsize
    out_bytes = jnp.dtype(out_dtype).itemsize
    # Dtype-aware sublane minimum: 8 (f32), 16 (bf16/f16), 32 (int8/fp8).
    sublane = max(8, 32 // in_bytes)

    vmem_capacity, cores = _tpu_vmem_and_cores()
    tile_budget = int(vmem_capacity * 0.40)     # streaming tiles + temps
    vmem_limit = int(vmem_capacity * 0.75)      # scoped limit handed to Mosaic

    # Physical lane footprint of one row (vregs are padded to 128 lanes).
    dim_vregs = _round_up(dim, 128)

    if block_rows is None:
        # Double-buffered input + output tiles, plus single-buffered in-kernel
        # f32 temporaries (xf and the normalized intermediate): ~8 B/elem.
        per_row = (2 * (in_bytes + out_bytes) + 8) * dim_vregs
        block_rows = max(sublane, (tile_budget // per_row) // sublane * sublane)
        # Keep enough grid steps: ~4 for pipelining on a single TC; >= 8 per
        # core on multi-TC chips (v7x megacore sharding).
        min_steps = 8 * cores if cores > 1 else 4
        if rows >= min_steps * sublane:
            block_rows = min(block_rows, _round_up(pl.cdiv(rows, min_steps), sublane))
        block_rows = min(block_rows, _round_up(rows, sublane))
        # Balance the grid across TensorCores (even per-core split on v7x).
        if cores > 1 and rows >= cores * sublane:
            steps = pl.cdiv(rows, block_rows)
            if steps % cores:
                steps = _round_up(steps, cores)
                block_rows = max(sublane, _round_up(pl.cdiv(rows, steps), sublane))
    else:
        block_rows = _round_up(block_rows, sublane)
        block_rows = min(block_rows, _round_up(rows, sublane))

    # TODO(synk): add a dim-tiled two-pass fallback for feature dims so large
    # that even a minimum-sublane row block exceeds the VMEM budget.

    grid = (pl.cdiv(rows, block_rows),)

    x2d = x.reshape(rows, dim)       # contiguous reshape: no copy
    w2d = weight.reshape(1, dim)

    compiler_kwargs = dict(dimension_semantics=("parallel",),
                           vmem_limit_bytes=vmem_limit)
    if allow_input_fusion is not None:
        compiler_kwargs["allow_input_fusion"] = allow_input_fusion

    out = pl.pallas_call(
        functools.partial(_rmsnorm_kernel, eps=float(eps), inv_dim=1.0 / dim),
        out_shape=jax.ShapeDtypeStruct((rows, dim), out_dtype),
        grid_spec=pltpu.PrefetchScalarGridSpec(
            num_scalar_prefetch=0,
            grid=grid,
            in_specs=[
                pl.BlockSpec((block_rows, dim), lambda i: (i, 0)),
                pl.BlockSpec((1, dim), lambda i: (0, 0)),
            ],
            out_specs=pl.BlockSpec((block_rows, dim), lambda i: (i, 0)),
        ),
        compiler_params=pltpu.CompilerParams(**compiler_kwargs),
    )(x2d, w2d)

    return out.reshape(orig_shape)


if __name__ == "__main__":
    eps = 1e-5
    k0, k1, k2 = jax.random.split(jax.random.PRNGKey(0), 3)

    # ---- f32 path, lane-aligned dim (module's default init: weight = ones) ----
    batch, seq, dim = 2, 8, 128
    x = jax.random.normal(k0, (batch, seq, dim), dtype=jnp.float32)
    weight = jnp.ones((dim,), dtype=jnp.float32)

    out = jax.block_until_ready(rmsnorm(x, weight, eps))

    xf = x.astype(jnp.float32)
    ref = (xf * jax.lax.rsqrt(jnp.mean(xf * xf, axis=-1, keepdims=True) + eps)
           ).astype(x.dtype) * weight
    assert out.shape == ref.shape and out.dtype == ref.dtype == jnp.float32
    assert float(jnp.max(jnp.abs(out - ref))) < 1e-5

    # ---- bf16 path, ragged dim/rows (no wrapper padding); default out = bf16 ----
    batch2, seq2, dim2 = 2, 12, 96
    x2 = jax.random.normal(k1, (batch2, seq2, dim2), dtype=jnp.bfloat16)
    w2 = jax.random.normal(k2, (dim2,), dtype=jnp.float32)

    out2 = jax.block_until_ready(rmsnorm(x2, w2, eps))

    x2f = x2.astype(jnp.float32)
    ref2 = (x2f * jax.lax.rsqrt(jnp.mean(x2f * x2f, axis=-1, keepdims=True) + eps)
            ).astype(x2.dtype) * w2               # torch value semantics (f32)
    assert out2.shape == x2.shape and out2.dtype == jnp.bfloat16
    assert float(jnp.max(jnp.abs(out2.astype(jnp.float32) - ref2))) < 1e-1

    # ---- strict torch-promotion parity path (bf16 * f32 -> f32 output) ----
    out2p = jax.block_until_ready(rmsnorm(x2, w2, eps, torch_promote=True))
    assert out2p.shape == ref2.shape and out2p.dtype == ref2.dtype == jnp.float32
    assert float(jnp.max(jnp.abs(out2p - ref2))) < 1e-2

    print("KERNEL_OK")
</pallas_src>

<mosaic_0001>
module attributes {stable_mosaic.version = 11 : i64} {
  func.func @_rmsnorm_kernel(%arg0: i32, %arg1: memref<16x128xf32, #tpu.memory_space<vmem>>, %arg2: memref<1x128xf32, #tpu.memory_space<vmem>>, %arg3: memref<16x128xf32, #tpu.memory_space<vmem>>) attributes {dimension_semantics = [#tpu.dimension_semantics<parallel>], iteration_bounds = array<i64: 1>, scalar_prefetch = 0 : i64, scratch_operands = 0 : i64, tpu.core_type = #tpu.core_type<tc>, window_params = [{transform_indices = @transform_0, window_bounds = array<i64: 16, 128>}, {pipeline_mode = #tpu.pipeline_mode<synchronous>, transform_indices = @transform_1, window_bounds = array<i64: 1, 128>}, {transform_indices = @transform_2, window_bounds = array<i64: 16, 128>}]} {
    %c0 = arith.constant 0 : index
    %c0_0 = arith.constant 0 : index
    %0 = vector.load %arg1[%c0, %c0_0] : memref<16x128xf32, #tpu.memory_space<vmem>>, vector<16x128xf32>
    %1 = arith.mulf %0, %0 : vector<16x128xf32>
    %cst = arith.constant dense<0.000000e+00> : vector<16xf32>
    %2 = vector.multi_reduction <add>, %1, %cst [1] : vector<16x128xf32> to vector<16xf32>
    %3 = vector.shape_cast %2 : vector<16xf32> to vector<16x1xf32>
    %cst_1 = arith.constant 7.812500e-03 : f32
    %4 = vector.broadcast %cst_1 : f32 to vector<16x1xf32>
    %5 = arith.mulf %3, %4 : vector<16x1xf32>
    %cst_2 = arith.constant 9.99999974E-6 : f32
    %6 = vector.broadcast %cst_2 : f32 to vector<16x1xf32>
    %7 = arith.addf %5, %6 : vector<16x1xf32>
    %8 = math.rsqrt %7 : vector<16x1xf32>
    %9 = vector.broadcast %8 : vector<16x1xf32> to vector<16x128xf32>
    %10 = arith.mulf %0, %9 : vector<16x128xf32>
    %c0_3 = arith.constant 0 : index
    %c0_4 = arith.constant 0 : index
    %11 = vector.load %arg2[%c0_3, %c0_4] : memref<1x128xf32, #tpu.memory_space<vmem>>, vector<1x128xf32>
    %12 = vector.broadcast %11 : vector<1x128xf32> to vector<16x128xf32>
    %13 = arith.mulf %10, %12 : vector<16x128xf32>
    %c0_5 = arith.constant 0 : index
    %c0_6 = arith.constant 0 : index
    %14 = vector.load %arg3[%c0_5, %c0_6] : memref<16x128xf32, #tpu.memory_space<vmem>>, vector<16x128xf32>
    tpu.vector_store %arg3[%c0_5, %c0_6], %13 {strides = array<i32>} : memref<16x128xf32, #tpu.memory_space<vmem>>, vector<16x128xf32>,
    return
  }
  func.func @transform_0(%arg0: i32) -> (i32, i32) {
    %c0_i32 = arith.constant 0 : i32
    %c0_i32_0 = arith.constant 0 : i32
    return %arg0, %c0_i32 : i32, i32
  }
  func.func @transform_1(%arg0: i32) -> (i32, i32) {
    %c0_i32 = arith.constant 0 : i32
    %c0_i32_0 = arith.constant 0 : i32
    %c0_i32_1 = arith.constant 0 : i32
    return %c0_i32, %c0_i32_0 : i32, i32
  }
  func.func @transform_2(%arg0: i32) -> (i32, i32) {
    %c0_i32 = arith.constant 0 : i32
    %c0_i32_0 = arith.constant 0 : i32
    return %arg0, %c0_i32 : i32, i32
  }
}

</mosaic_0001>

<llo_original>
// kernel: tpu_custom_call.1
$region0: #{tpu_custom_call.1}
  #allocation0 [shape = 'u32[]', space=smem, size = 0x4, offset = 0x4, fixed_abs, tag = 'smem constant byte address 0x4 - core index']
  #allocation1 [shape = 'u32[144,128]{1,0:T(1,128)}', space=vmem, size = 0x12000, scoped, tag = 'internal scratch']
  %s0 = inlined_call_operand.hbm [shape: f32[16,128], index: 0, kind: input, shape index: {}]
  %s1 = inlined_call_operand.vmem [shape: f32[1,128], index: 1, kind: input, shape index: {}]
  %s2 = inlined_call_operand.hbm [shape: f32[16,128], index: 2, kind: output, shape index: {}]
  %s3 = sld [smem:[#allocation0]]
  $region22: #{tpu_custom_call.1} parent=0
    _
  %s5 = ssub.s32 1, %s3
  %s6 = scalar_select 0, %s5, %s3
  $region1: #{tpu_custom_call.1} parent=0
    #allocation2 [shape = 'u8[8192]{0}', space=vmem, size = 0x2000, scoped, tag = 'input window, operand 0, single buffered']
    #allocation3 [shape = 's32[1]{0}', space=sflag, size = 0x4, scoped, tag = 'scoped memory for tpu_custom_call.1']
    #allocation4 [shape = 's32[1]{0}', space=sflag, size = 0x4, scoped, tag = 'scoped memory for tpu_custom_call.1']
    #allocation5 [shape = 'u8[8192]{0}', space=vmem, size = 0x2000, scoped, tag = 'output window, operand 0, single buffered']
    %7 = vsyncpa [#allocation3], 0
    %8 = vsyncpa [#allocation4], 0
    // Predicated region
    $region2: #{tpu_custom_call.1} parent=1 // pred_check
      _
    $region3: #{tpu_custom_call.1} parent=1 // pred_check_branch
      %10 = sbr.rel (0) target = $region5
    $region4: #{tpu_custom_call.1} parent=1 // pred_region
      %s12 = ssub.s32 256, 256
      %13 = vsyncadd [#allocation3], %s12
      %s14 = sshll.u32 [#allocation2], 4
      %s15 = int_to_ptr.vmem [resolvable:$true] %s14
      %20 = dma.hbm_to_vmem [thread:$0]  %s0, 256, %s15, [#allocation3], 128, 128, 8
    $region5: #{tpu_custom_call.1} parent=1 // pred_fallthru
      _
    // Predicated region
    $region6: #{tpu_custom_call.1} parent=1 // pred_check
      _
    $region7: #{tpu_custom_call.1} parent=1 // pred_check_branch
      %22 = sbr.rel (0) target = $region9
    $region8: #{tpu_custom_call.1} parent=1 // pred_region
      _
    $region9: #{tpu_custom_call.1} parent=1 // pred_fallthru
      _
    // Predicated region
    $region10: #{tpu_custom_call.1} parent=1 // pred_check
      _
    $region11: #{tpu_custom_call.1} parent=1 // pred_check_branch
      %24 = sbr.rel (0) target = $region13
    $region12: #{tpu_custom_call.1} parent=1 // pred_region
      %25 = dma.done [#allocation3], 256
    $region13: #{tpu_custom_call.1} parent=1 // pred_fallthru
      _
    %v26 = vld [vmem:[#allocation2] sm:$0xff]
    %v27 = vld [vmem:[#allocation2 + $0x8] sm:$0xff]
    %v28 = vmul.f32 %v26, %v26
    %v29 = vmul.f32 %v27, %v27
    %30 = vadd.xlane.f32.xlu0 %v28
    %v31 = vpop.xlane.xlu0 %30
    %32 = vadd.xlane.f32.xlu0 %v29
    %v33 = vpop.xlane.xlu0 %32
    %v34 = vmul.f32 %v31, 0.0078125
    %v35 = vmul.f32 %v33, 0.0078125
    %v36 = vadd.f32 %v34, 1e-05
    %v37 = vadd.f32 %v35, 1e-05
    %v38 = vrsqrt.pop %v36
    %v39 = vrsqrt.pop %v37
    %v40 = vmul.f32 %v26, %v38
    %v41 = vmul.f32 %v27, %v39
    %v42 = vld [vmem:[%s1] sm:$0x1]
    %v44 = vlaneseq
    %v45 = vshrl.u32 %v44, 7
    %v46 = vsub.s32 0, %v45
    %v47 = vrot.slane %v42, %v46
    %v49 = vmul.f32 %v40, %v47
    %v50 = vmul.f32 %v41, %v47
    %51 = vst [vmem:[#allocation5] sm:$0xff] %v49
    %52 = vst [vmem:[#allocation5 + $0x8] sm:$0xff] %v50
    // Predicated region
    $region14: #{tpu_custom_call.1} parent=1 // pred_check
      _
    $region15: #{tpu_custom_call.1} parent=1 // pred_check_branch
      %54 = sbr.rel (0) target = $region17
    $region16: #{tpu_custom_call.1} parent=1 // pred_region
      %s56 = ssub.s32 256, 256
      %57 = vsyncadd [#allocation4], %s56
      %s58 = sshll.u32 [#allocation5], 4
      %s59 = int_to_ptr.vmem [resolvable:$true] %s58
      %64 = dma.vmem_to_hbm [thread:$0]  %s59, 256, %s2, [#allocation4], 128, 128, 8
    $region17: #{tpu_custom_call.1} parent=1 // pred_fallthru
      _
    // Predicated region
    $region18: #{tpu_custom_call.1} parent=1 // pred_check
      _
    $region19: #{tpu_custom_call.1} parent=1 // pred_check_branch
      %66 = sbr.rel (0) target = $region21
    $region20: #{tpu_custom_call.1} parent=1 // pred_region
      %67 = dma.done [#allocation4], 256
    $region21: #{tpu_custom_call.1} parent=1 // pred_fallthru
      _
    %68 = vsyncpa [#allocation3], 1
    %69 = vsyncpa [#allocation4], 1

</llo_original>
